<compile_context>
chip_gen: v5e
topology: v5e:2x2
jax: 0.10.0
libtpu: 0.0.40
codegen_flags: <defaults>
</compile_context>

<pallas_src>
import jax
import jax.numpy as jnp
from jax.experimental import pallas as pl
from jax.experimental.pallas import tpu as pltpu

LEAKY_SLOPE = 0.01   # nn.LeakyReLU default negative_slope
IN_EPS = 1e-5        # nn.InstanceNorm3d default eps (affine=False by default)


def conv_block_kernel(xcol_ref, w_ref, b_ref, o_ref):
    # xcol_ref: (1, K, S)   im2col patches of one sample, K = C_in*27, S = D*H*W
    # w_ref:    (C_out, K)  flattened Conv3d weight
    # b_ref:    (C_out, 1)  bias, broadcast over the spatial lanes
    # o_ref:    (1, C_out, S)  output (NCDHW order once reshaped in the wrapper)
    xcol = xcol_ref[0, :, :]                                  # (K, S)
    w = w_ref[...]                                            # (C_out, K)

    # Conv3d(kernel_size=3, padding=1) == W_flat @ im2col  (+ bias).
    y = jnp.dot(w, xcol, preferred_element_type=jnp.float32) + b_ref[...]

    # Dropout3d(p=0.5, inplace=True): identity in eval mode (see TODO above).

    # InstanceNorm3d: per-(sample, channel) stats over all spatial positions,
    # biased variance, no affine params (PyTorch defaults).
    mean = jnp.mean(y, axis=1, keepdims=True)                 # (C_out, 1)
    centered = y - mean
    var = jnp.mean(centered * centered, axis=1, keepdims=True)
    y = centered * jax.lax.rsqrt(var + IN_EPS)                # EUP rsqrt

    # LeakyReLU (negative_slope = 0.01)
    y = jnp.where(y >= 0, y, LEAKY_SLOPE * y)

    o_ref[0, :, :] = y.astype(o_ref.dtype)


def _im2col_3d(x):
    """(N, C, D, H, W) -> (N, C*27, D*H*W) patches for a 3x3x3, pad=1 conv.

    Ordering of the K axis is (c_in, kd, kh, kw), matching
    weight.reshape(C_out, C_in*27) of a PyTorch (C_out, C_in, 3, 3, 3) weight.
    """
    N, C, D, H, W = x.shape
    xp = jnp.pad(x, ((0, 0), (0, 0), (1, 1), (1, 1), (1, 1)))
    cols = [xp[:, :, kd:kd + D, kh:kh + H, kw:kw + W]
            for kd in range(3) for kh in range(3) for kw in range(3)]
    cols = jnp.stack(cols, axis=2)                            # (N, C, 27, D, H, W)
    return cols.reshape(N, C * 27, D * H * W)


def conv_block(x, weight, bias):
    """One ConvBlock: Conv3d(3, pad=1) -> Dropout3d(eval) -> InstanceNorm3d -> LeakyReLU.

    x: (N, C_in, D, H, W); weight: (C_out, C_in, 3, 3, 3); bias: (C_out,).
    """
    N, C_in, D, H, W = x.shape
    C_out = weight.shape[0]
    S = D * H * W
    K = C_in * 27

    xcol = _im2col_3d(x)                                      # (N, K, S)
    w_mat = weight.reshape(C_out, K)
    b_col = bias.reshape(C_out, 1)

    out = pl.pallas_call(
        conv_block_kernel,
        out_shape=jax.ShapeDtypeStruct((N, C_out, S), x.dtype),
        grid_spec=pltpu.PrefetchScalarGridSpec(
            num_scalar_prefetch=0,
            grid=(N,),
            in_specs=[
                pl.BlockSpec((1, K, S), lambda n: (n, 0, 0)),   # im2col, spatial on lanes
                pl.BlockSpec((C_out, K), lambda n: (0, 0)),     # weight (grid-invariant)
                pl.BlockSpec((C_out, 1), lambda n: (0, 0)),     # bias   (grid-invariant)
            ],
            out_specs=pl.BlockSpec((1, C_out, S), lambda n: (n, 0, 0)),
        ),
        compiler_params=pltpu.CompilerParams(
            dimension_semantics=("parallel",),                  # shard samples across TCs
            vmem_limit_bytes=32 * 1024 * 1024,
        ),
    )(xcol, w_mat, b_col)

    return out.reshape(N, C_out, D, H, W)                     # already NCDHW, no transpose


@jax.jit
def conv_block_stack(x, params):
    """ConvBlockStack.forward: chain the per-block kernel over all stacks."""
    for weight, bias in params:
        x = conv_block(x, weight, bias)
    return x


# ---------------------------------------------------------------------------
# Pure-JAX reference (for correctness check)
# ---------------------------------------------------------------------------
def conv_block_ref(x, weight, bias):
    y = jax.lax.conv_general_dilated(
        x, weight, window_strides=(1, 1, 1),
        padding=((1, 1), (1, 1), (1, 1)),
        dimension_numbers=("NCDHW", "OIDHW", "NCDHW"))
    y = y + bias[None, :, None, None, None]
    mean = jnp.mean(y, axis=(2, 3, 4), keepdims=True)
    var = jnp.mean((y - mean) ** 2, axis=(2, 3, 4), keepdims=True)
    y = (y - mean) / jnp.sqrt(var + IN_EPS)
    return jnp.where(y >= 0, y, LEAKY_SLOPE * y)


def conv_block_stack_ref(x, params):
    for weight, bias in params:
        x = conv_block_ref(x, weight, bias)
    return x


if __name__ == "__main__":
    key = jax.random.PRNGKey(0)
    k_x, k_w1, k_b1, k_w2, k_b2 = jax.random.split(key, 5)

    # Small shapes consistent with the module: num_stacks=2,
    # in_channels=4 -> out_channels=8, spatial 8^3  (S = 512, lane-dense).
    N, C_in, C_out, D, H, W = 2, 4, 8, 8, 8, 8

    x = jax.random.normal(k_x, (N, C_in, D, H, W), dtype=jnp.float32)
    w1 = jax.random.normal(k_w1, (C_out, C_in, 3, 3, 3), dtype=jnp.float32) * 0.1
    b1 = jax.random.normal(k_b1, (C_out,), dtype=jnp.float32) * 0.1
    w2 = jax.random.normal(k_w2, (C_out, C_out, 3, 3, 3), dtype=jnp.float32) * 0.1
    b2 = jax.random.normal(k_b2, (C_out,), dtype=jnp.float32) * 0.1

    params = ((w1, b1), (w2, b2))                             # num_stacks = 2

    out = conv_block_stack(x, params)
    out = jax.block_until_ready(out)

    ref = conv_block_stack_ref(x, params)
    assert out.shape == (N, C_out, D, H, W)
    # Default TPU f32 matmul precision is bf16-class for both the Pallas dot
    # and the XLA reference conv; tolerance accounts for two stacked blocks.
    assert jnp.allclose(out, ref, atol=2e-2, rtol=2e-2), "mismatch vs reference"

    print("KERNEL_OK")
</pallas_src>

<mosaic_0001>
module attributes {stable_mosaic.version = 11 : i64} {
  func.func @conv_block_kernel(%arg0: i32, %arg1: memref<1x108x512xf32, #tpu.memory_space<vmem>>, %arg2: memref<8x108xf32, #tpu.memory_space<vmem>>, %arg3: memref<8x1xf32, #tpu.memory_space<vmem>>, %arg4: memref<1x8x512xf32, #tpu.memory_space<vmem>>) attributes {dimension_semantics = [#tpu.dimension_semantics<parallel>], iteration_bounds = array<i64: 2>, scalar_prefetch = 0 : i64, scratch_operands = 0 : i64, tpu.core_type = #tpu.core_type<tc>, window_params = [{transform_indices = @transform_0, window_bounds = array<i64: 1, 108, 512>}, {pipeline_mode = #tpu.pipeline_mode<synchronous>, transform_indices = @transform_1, window_bounds = array<i64: 8, 108>}, {pipeline_mode = #tpu.pipeline_mode<synchronous>, transform_indices = @transform_2, window_bounds = array<i64: 8, 1>}, {transform_indices = @transform_3, window_bounds = array<i64: 1, 8, 512>}]} {
    %c0 = arith.constant 0 : index
    %c0_0 = arith.constant 0 : index
    %c0_1 = arith.constant 0 : index
    %0 = vector.load %arg1[%c0, %c0_0, %c0_1] : memref<1x108x512xf32, #tpu.memory_space<vmem>>, vector<1x108x512xf32>
    %1 = vector.shape_cast %0 : vector<1x108x512xf32> to vector<108x512xf32>
    %c0_2 = arith.constant 0 : index
    %c0_3 = arith.constant 0 : index
    %2 = vector.load %arg2[%c0_2, %c0_3] : memref<8x108xf32, #tpu.memory_space<vmem>>, vector<8x108xf32>
    %cst = arith.constant dense<0.000000e+00> : vector<8x512xf32>
    %3 = tpu.matmul %2, %1, %cst {dimension_numbers = #tpu.dot_dimension_numbers<[1], [0], [0], [1], [0, 0, 1, 1], [], []>} : vector<8x108xf32>, vector<108x512xf32>, vector<8x512xf32> -> vector<8x512xf32>
    %c0_4 = arith.constant 0 : index
    %c0_5 = arith.constant 0 : index
    %4 = vector.load %arg3[%c0_4, %c0_5] : memref<8x1xf32, #tpu.memory_space<vmem>>, vector<8x1xf32>
    %5 = vector.broadcast %4 : vector<8x1xf32> to vector<8x512xf32>
    %6 = arith.addf %3, %5 : vector<8x512xf32>
    %cst_6 = arith.constant dense<0.000000e+00> : vector<8xf32>
    %7 = vector.multi_reduction <add>, %6, %cst_6 [1] : vector<8x512xf32> to vector<8xf32>
    %8 = vector.shape_cast %7 : vector<8xf32> to vector<8x1xf32>
    %cst_7 = arith.constant 5.120000e+02 : f32
    %9 = vector.broadcast %cst_7 : f32 to vector<8x1xf32>
    %10 = arith.divf %8, %9 : vector<8x1xf32>
    %11 = vector.broadcast %10 : vector<8x1xf32> to vector<8x512xf32>
    %12 = arith.subf %6, %11 : vector<8x512xf32>
    %13 = arith.mulf %12, %12 : vector<8x512xf32>
    %cst_8 = arith.constant dense<0.000000e+00> : vector<8xf32>
    %14 = vector.multi_reduction <add>, %13, %cst_8 [1] : vector<8x512xf32> to vector<8xf32>
    %15 = vector.shape_cast %14 : vector<8xf32> to vector<8x1xf32>
    %cst_9 = arith.constant 5.120000e+02 : f32
    %16 = vector.broadcast %cst_9 : f32 to vector<8x1xf32>
    %17 = arith.divf %15, %16 : vector<8x1xf32>
    %cst_10 = arith.constant 9.99999974E-6 : f32
    %18 = vector.broadcast %cst_10 : f32 to vector<8x1xf32>
    %19 = arith.addf %17, %18 : vector<8x1xf32>
    %20 = math.rsqrt %19 : vector<8x1xf32>
    %21 = vector.broadcast %20 : vector<8x1xf32> to vector<8x512xf32>
    %22 = arith.mulf %12, %21 : vector<8x512xf32>
    %cst_11 = arith.constant 0.000000e+00 : f32
    %23 = vector.broadcast %cst_11 : f32 to vector<8x512xf32>
    %24 = arith.cmpf oge, %22, %23 : vector<8x512xf32>
    %cst_12 = arith.constant 0.00999999977 : f32
    %25 = vector.broadcast %cst_12 : f32 to vector<8x512xf32>
    %26 = arith.mulf %25, %22 : vector<8x512xf32>
    %27 = arith.select %24, %22, %26 : vector<8x512xi1>, vector<8x512xf32>
    %c0_13 = arith.constant 0 : index
    %c0_14 = arith.constant 0 : index
    %c0_15 = arith.constant 0 : index
    %28 = vector.load %arg4[%c0_13, %c0_14, %c0_15] : memref<1x8x512xf32, #tpu.memory_space<vmem>>, vector<1x8x512xf32>
    %29 = vector.shape_cast %28 : vector<1x8x512xf32> to vector<8x512xf32>
    %30 = vector.shape_cast %27 : vector<8x512xf32> to vector<1x8x512xf32>
    tpu.vector_store %arg4[%c0_13, %c0_14, %c0_15], %30 {strides = array<i32>} : memref<1x8x512xf32, #tpu.memory_space<vmem>>, vector<1x8x512xf32>,
    return
  }
  func.func @transform_0(%arg0: i32) -> (i32, i32, i32) {
    %c0_i32 = arith.constant 0 : i32
    %c0_i32_0 = arith.constant 0 : i32
    %c0_i32_1 = arith.constant 0 : i32
    return %arg0, %c0_i32, %c0_i32_0 : i32, i32, i32
  }
  func.func @transform_1(%arg0: i32) -> (i32, i32) {
    %c0_i32 = arith.constant 0 : i32
    %c0_i32_0 = arith.constant 0 : i32
    %c0_i32_1 = arith.constant 0 : i32
    return %c0_i32, %c0_i32_0 : i32, i32
  }
  func.func @transform_2(%arg0: i32) -> (i32, i32) {
    %c0_i32 = arith.constant 0 : i32
    %c0_i32_0 = arith.constant 0 : i32
    %c0_i32_1 = arith.constant 0 : i32
    return %c0_i32, %c0_i32_0 : i32, i32
  }
  func.func @transform_3(%arg0: i32) -> (i32, i32, i32) {
    %c0_i32 = arith.constant 0 : i32
    %c0_i32_0 = arith.constant 0 : i32
    %c0_i32_1 = arith.constant 0 : i32
    return %arg0, %c0_i32, %c0_i32_0 : i32, i32, i32
  }
}

module attributes {stable_mosaic.version = 11 : i64} {
  func.func @conv_block_kernel(%arg0: i32, %arg1: memref<1x216x512xf32, #tpu.memory_space<vmem>>, %arg2: memref<8x216xf32, #tpu.memory_space<vmem>>, %arg3: memref<8x1xf32, #tpu.memory_space<vmem>>, %arg4: memref<1x8x512xf32, #tpu.memory_space<vmem>>) attributes {dimension_semantics = [#tpu.dimension_semantics<parallel>], iteration_bounds = array<i64: 2>, scalar_prefetch = 0 : i64, scratch_operands = 0 : i64, tpu.core_type = #tpu.core_type<tc>, window_params = [{transform_indices = @transform_0, window_bounds = array<i64: 1, 216, 512>}, {pipeline_mode = #tpu.pipeline_mode<synchronous>, transform_indices = @transform_1, window_bounds = array<i64: 8, 216>}, {pipeline_mode = #tpu.pipeline_mode<synchronous>, transform_indices = @transform_2, window_bounds = array<i64: 8, 1>}, {transform_indices = @transform_3, window_bounds = array<i64: 1, 8, 512>}]} {
    %c0 = arith.constant 0 : index
    %c0_0 = arith.constant 0 : index
    %c0_1 = arith.constant 0 : index
    %0 = vector.load %arg1[%c0, %c0_0, %c0_1] : memref<1x216x512xf32, #tpu.memory_space<vmem>>, vector<1x216x512xf32>
    %1 = vector.shape_cast %0 : vector<1x216x512xf32> to vector<216x512xf32>
    %c0_2 = arith.constant 0 : index
    %c0_3 = arith.constant 0 : index
    %2 = vector.load %arg2[%c0_2, %c0_3] : memref<8x216xf32, #tpu.memory_space<vmem>>, vector<8x216xf32>
    %cst = arith.constant dense<0.000000e+00> : vector<8x512xf32>
    %3 = tpu.matmul %2, %1, %cst {dimension_numbers = #tpu.dot_dimension_numbers<[1], [0], [0], [1], [0, 0, 1, 1], [], []>} : vector<8x216xf32>, vector<216x512xf32>, vector<8x512xf32> -> vector<8x512xf32>
    %c0_4 = arith.constant 0 : index
    %c0_5 = arith.constant 0 : index
    %4 = vector.load %arg3[%c0_4, %c0_5] : memref<8x1xf32, #tpu.memory_space<vmem>>, vector<8x1xf32>
    %5 = vector.broadcast %4 : vector<8x1xf32> to vector<8x512xf32>
    %6 = arith.addf %3, %5 : vector<8x512xf32>
    %cst_6 = arith.constant dense<0.000000e+00> : vector<8xf32>
    %7 = vector.multi_reduction <add>, %6, %cst_6 [1] : vector<8x512xf32> to vector<8xf32>
    %8 = vector.shape_cast %7 : vector<8xf32> to vector<8x1xf32>
    %cst_7 = arith.constant 5.120000e+02 : f32
    %9 = vector.broadcast %cst_7 : f32 to vector<8x1xf32>
    %10 = arith.divf %8, %9 : vector<8x1xf32>
    %11 = vector.broadcast %10 : vector<8x1xf32> to vector<8x512xf32>
    %12 = arith.subf %6, %11 : vector<8x512xf32>
    %13 = arith.mulf %12, %12 : vector<8x512xf32>
    %cst_8 = arith.constant dense<0.000000e+00> : vector<8xf32>
    %14 = vector.multi_reduction <add>, %13, %cst_8 [1] : vector<8x512xf32> to vector<8xf32>
    %15 = vector.shape_cast %14 : vector<8xf32> to vector<8x1xf32>
    %cst_9 = arith.constant 5.120000e+02 : f32
    %16 = vector.broadcast %cst_9 : f32 to vector<8x1xf32>
    %17 = arith.divf %15, %16 : vector<8x1xf32>
    %cst_10 = arith.constant 9.99999974E-6 : f32
    %18 = vector.broadcast %cst_10 : f32 to vector<8x1xf32>
    %19 = arith.addf %17, %18 : vector<8x1xf32>
    %20 = math.rsqrt %19 : vector<8x1xf32>
    %21 = vector.broadcast %20 : vector<8x1xf32> to vector<8x512xf32>
    %22 = arith.mulf %12, %21 : vector<8x512xf32>
    %cst_11 = arith.constant 0.000000e+00 : f32
    %23 = vector.broadcast %cst_11 : f32 to vector<8x512xf32>
    %24 = arith.cmpf oge, %22, %23 : vector<8x512xf32>
    %cst_12 = arith.constant 0.00999999977 : f32
    %25 = vector.broadcast %cst_12 : f32 to vector<8x512xf32>
    %26 = arith.mulf %25, %22 : vector<8x512xf32>
    %27 = arith.select %24, %22, %26 : vector<8x512xi1>, vector<8x512xf32>
    %c0_13 = arith.constant 0 : index
    %c0_14 = arith.constant 0 : index
    %c0_15 = arith.constant 0 : index
    %28 = vector.load %arg4[%c0_13, %c0_14, %c0_15] : memref<1x8x512xf32, #tpu.memory_space<vmem>>, vector<1x8x512xf32>
    %29 = vector.shape_cast %28 : vector<1x8x512xf32> to vector<8x512xf32>
    %30 = vector.shape_cast %27 : vector<8x512xf32> to vector<1x8x512xf32>
    tpu.vector_store %arg4[%c0_13, %c0_14, %c0_15], %30 {strides = array<i32>} : memref<1x8x512xf32, #tpu.memory_space<vmem>>, vector<1x8x512xf32>,
    return
  }
  func.func @transform_0(%arg0: i32) -> (i32, i32, i32) {
    %c0_i32 = arith.constant 0 : i32
    %c0_i32_0 = arith.constant 0 : i32
    %c0_i32_1 = arith.constant 0 : i32
    return %arg0, %c0_i32, %c0_i32_0 : i32, i32, i32
  }
  func.func @transform_1(%arg0: i32) -> (i32, i32) {
    %c0_i32 = arith.constant 0 : i32
    %c0_i32_0 = arith.constant 0 : i32
    %c0_i32_1 = arith.constant 0 : i32
    return %c0_i32, %c0_i32_0 : i32, i32
  }
  func.func @transform_2(%arg0: i32) -> (i32, i32) {
    %c0_i32 = arith.constant 0 : i32
    %c0_i32_0 = arith.constant 0 : i32
    %c0_i32_1 = arith.constant 0 : i32
    return %c0_i32, %c0_i32_0 : i32, i32
  }
  func.func @transform_3(%arg0: i32) -> (i32, i32, i32) {
    %c0_i32 = arith.constant 0 : i32
    %c0_i32_0 = arith.constant 0 : i32
    %c0_i32_1 = arith.constant 0 : i32
    return %arg0, %c0_i32, %c0_i32_0 : i32, i32, i32
  }
}

</mosaic_0001>

<llo_original>
// kernel: conv_block_stack.2
$region0: #{conv_block_stack.2}
  #allocation0 [shape = 'u32[]', space=smem, size = 0x4, offset = 0x4, fixed_abs, tag = 'smem constant byte address 0x4 - core index']
  #allocation1 [shape = 'u32[72,128]{1,0:T(1,128)}', space=vmem, size = 0x9000, scoped, tag = 'internal scratch']
  %s0 = inlined_call_operand.vmem [shape: f32[2,108,512], index: 0, kind: input, shape index: {}]
  %s1 = inlined_call_operand.vmem [shape: f32[8,108], index: 1, kind: input, shape index: {}]
  %s2 = inlined_call_operand.vmem [shape: f32[8,1], index: 2, kind: input, shape index: {}]
  %s3 = inlined_call_operand.vmem [shape: f32[2,8,512], index: 3, kind: output, shape index: {}]
  %s4 = sld [smem:[#allocation0]]
  $region45: #{conv_block_stack.2} parent=0
    _
  %s6 = ssub.s32 1, %s4
  %s7 = scalar_select 0, %s6, %s4
  loop: start=0, step=1, limit=4
  $region2: #{conv_block_stack.2} parent=0 // loop_pre_header
    _
  $region3: #{conv_block_stack.2} parent=0 // loop_header
    %s9 = sphi 0, %s13
    %p10 = scmp.ge.s32.totalorder %s9, 4
    %s19 = sphi 0, %s21
    %s22 = sphi 0, %s19
    %s23 = sphi 0, %s22
    %s39 = sphi 0, %s23
    %s43 = sphi 0, %s43
    %s45 = sphi 0, %s43
    %s46 = sphi 0, %s45
    %s60 = sphi 0, %s46
    %s64 = sphi 0, %s64
    %s66 = sphi 0, %s64
    %s67 = sphi 0, %s66
    %s81 = sphi 0, %s67
    %s87 = sphi 0, %s89
    %s90 = sphi 0, %s87
    %s91 = sphi 0, %s90
    %s107 = sphi 0, %s91
  $region4: #{conv_block_stack.2} parent=0 // loop_header_branch
    %12 = sbr.rel (%p10) target = $region8
  $region5: #{conv_block_stack.2} parent=0 // loop_body
    %s14 = ssub.s32 %s9, 1
    %s15 = ssub.s32 %s9, 2
    %s16 = sadd.s32 %s9, 1
    %s17 = ssub.s32 %s9, %s16
    %p18 = scmp.eq.s32.totalorder %s17, 0
    %s20 = sadd.s32 %s19, 1
    %s21 = scalar_select %p18, %s19, %s20
    %p24 = pneg %p18
    %p25 = scmp.eq.s32.totalorder %s9, 1
    %p26 = por %p24, %p25
    %p27 = scmp.ne.s32.totalorder %s19, %s22
    %p28 = scmp.eq.s32.totalorder %s9, 0
    %p29 = por %p27, %p28
    %p30 = scmp.ne.s32.totalorder %s19, %s22
    %p31 = scmp.eq.s32.totalorder %s14, 1
    %p32 = por %p30, %p31
    %p33 = scmp.ne.s32.totalorder %s22, %s23
    %p34 = scmp.eq.s32.totalorder %s14, 0
    %p35 = por %p33, %p34
    %p36 = scmp.ne.s32.totalorder %s22, %s23
    %p37 = scmp.eq.s32.totalorder %s15, 1
    %p38 = por %p36, %p37
    %p40 = scmp.ne.s32.totalorder %s23, %s39
    %p41 = scmp.eq.s32.totalorder %s15, 0
    %p42 = por %p40, %p41
    %s44 = sadd.s32 %s43, 1
    %p47 = scmp.eq.s32.totalorder %s9, 1
    %p48 = scmp.ne.s32.totalorder %s43, %s45
    %p49 = scmp.eq.s32.totalorder %s9, 0
    %p50 = por %p48, %p49
    %p51 = scmp.ne.s32.totalorder %s43, %s45
    %p52 = scmp.eq.s32.totalorder %s14, 1
    %p53 = por %p51, %p52
    %p54 = scmp.ne.s32.totalorder %s45, %s46
    %p55 = scmp.eq.s32.totalorder %s14, 0
    %p56 = por %p54, %p55
    %p57 = scmp.ne.s32.totalorder %s45, %s46
    %p58 = scmp.eq.s32.totalorder %s15, 1
    %p59 = por %p57, %p58
    %p61 = scmp.ne.s32.totalorder %s46, %s60
    %p62 = scmp.eq.s32.totalorder %s15, 0
    %p63 = por %p61, %p62
    %s65 = sadd.s32 %s64, 1
    %p68 = scmp.eq.s32.totalorder %s9, 1
    %p69 = scmp.ne.s32.totalorder %s64, %s66
    %p70 = scmp.eq.s32.totalorder %s9, 0
    %p71 = por %p69, %p70
    %p72 = scmp.ne.s32.totalorder %s64, %s66
    %p73 = scmp.eq.s32.totalorder %s14, 1
    %p74 = por %p72, %p73
    %p75 = scmp.ne.s32.totalorder %s66, %s67
    %p76 = scmp.eq.s32.totalorder %s14, 0
    %p77 = por %p75, %p76
    %p78 = scmp.ne.s32.totalorder %s66, %s67
    %p79 = scmp.eq.s32.totalorder %s15, 1
    %p80 = por %p78, %p79
    %p82 = scmp.ne.s32.totalorder %s67, %s81
    %p83 = scmp.eq.s32.totalorder %s15, 0
    %p84 = por %p82, %p83
    %s85 = ssub.s32 %s9, %s16
    %p86 = scmp.eq.s32.totalorder %s85, 0
    %s88 = sadd.s32 %s87, 1
    %s89 = scalar_select %p86, %s87, %s88
    %p92 = pneg %p86
    %p93 = scmp.eq.s32.totalorder %s9, 1
    %p94 = por %p92, %p93
    %p95 = scmp.ne.s32.totalorder %s87, %s90
    %p96 = scmp.eq.s32.totalorder %s9, 0
    %p97 = por %p95, %p96
    %p98 = scmp.ne.s32.totalorder %s87, %s90
    %p99 = scmp.eq.s32.totalorder %s14, 1
    %p100 = por %p98, %p99
    %p101 = scmp.ne.s32.totalorder %s90, %s91
    %p102 = scmp.eq.s32.totalorder %s14, 0
    %p103 = por %p101, %p102
    %p104 = scmp.ne.s32.totalorder %s90, %s91
    %p105 = scmp.eq.s32.totalorder %s15, 1
    %p106 = por %p104, %p105
    %p108 = scmp.ne.s32.totalorder %s91, %s107
    %p109 = scmp.eq.s32.totalorder %s15, 0
    %p110 = por %p108, %p109
    %p111 = scmp.le.s32.totalorder 1, %s9
    %p112 = scmp.lt.s32.totalorder %s9, 3
    %p113 = pnand %p111, %p112
    %p114 = pneg %p113
    // Predicated region
    $region9: #{conv_block_stack.2} parent=5 // pred_check
      _
    $region10: #{conv_block_stack.2} parent=5 // pred_check_branch
      %116 = sbr.rel (%p113) target = $region12
    $region11: #{conv_block_stack.2} parent=5 // pred_region
      %s117 = ssub.s32 %s9, 1
      // Predicated region
      $region13: #{conv_block_stack.2} parent=11 // pred_check
        %p118 = pneg %p56
      $region14: #{conv_block_stack.2} parent=11 // pred_check_branch
        %120 = sbr.rel (%p118) target = $region16
      $region15: #{conv_block_stack.2} parent=11 // pred_region
        _
      $region16: #{conv_block_stack.2} parent=11 // pred_fallthru
        _
      // Predicated region
      $region17: #{conv_block_stack.2} parent=11 // pred_check
        %p121 = pneg %p77
      $region18: #{conv_block_stack.2} parent=11 // pred_check_branch
        %123 = sbr.rel (%p121) target = $region20
      $region19: #{conv_block_stack.2} parent=11 // pred_region
        _
      $region20: #{conv_block_stack.2} parent=11 // pred_fallthru
        _
    $region12: #{conv_block_stack.2} parent=5 // pred_fallthru
      _
    %p124 = scmp.lt.s32.totalorder %s9, 2
    // Predicated region
    $region21: #{conv_block_stack.2} parent=5 // pred_check
      %p125 = pneg %p124
    $region22: #{conv_block_stack.2} parent=5 // pred_check_branch
      %127 = sbr.rel (%p125) target = $region24
    $region23: #{conv_block_stack.2} parent=5 // pred_region
      // Predicated region
      $region25: #{conv_block_stack.2} parent=23 // pred_check
        %p128 = pneg %p29
      $region26: #{conv_block_stack.2} parent=23 // pred_check_branch
        %130 = sbr.rel (%p128) target = $region28
      $region27: #{conv_block_stack.2} parent=23 // pred_region
        %p131 = scmp.lt.s32.totalorder %s9, 1
        %s132 = scalar_select %p131, %s9, 1
        %s133 = smul.addr %s132, 56
        %s134 = smul.addr %s133, 8
        %s135 = scalar_lea.vmem %s0, %s134
      $region28: #{conv_block_stack.2} parent=23 // pred_fallthru
        _
    $region24: #{conv_block_stack.2} parent=5 // pred_fallthru
      _
    %p136 = scmp.le.s32.totalorder 1, %s9
    %p137 = scmp.lt.s32.totalorder %s9, 3
    %p138 = pnand %p136, %p137
    %p139 = pneg %p138
    // Predicated region
    $region29: #{conv_block_stack.2} parent=5 // pred_check
      _
    $region30: #{conv_block_stack.2} parent=5 // pred_check_branch
      %141 = sbr.rel (%p138) target = $region32
    $region31: #{conv_block_stack.2} parent=5 // pred_region
      %s142 = ssub.s32 %s9, 1
      %p143 = scmp.lt.s32.totalorder %s14, 1
      %s144 = scalar_select %p143, %s14, 1
      %s145 = smul.addr %s144, 56
      %s146 = smul.addr %s145, 8
      %s147 = scalar_lea.vmem %s0, %s146
      %p148 = pneg %p35
      %p149 = pneg %p32
      %p150 = pneg %p56
      %p151 = pneg %p53
      %p152 = pneg %p77
      %p153 = pneg %p74
      %p154 = pneg %p103
      %p155 = pneg %p100
      %p156 = scmp.lt.s32.totalorder %s14, 1
      %s157 = scalar_select %p156, %s14, 1
      %s158 = smul.addr %s157, 4
      %s159 = smul.addr %s158, 8
      %s160 = scalar_lea.vmem %s3, %s159
      %p161 = scmp.lt.s32.totalorder %s14, 1
      %s162 = scalar_select %p161, %s14, 1
      %s163 = smul.addr %s162, 56
      %s164 = smul.addr %s163, 8
      %s165 = scalar_lea.vmem %s0, %s164
      %p166 = scmp.lt.s32.totalorder %s14, 1
      %s167 = scalar_select %p166, %s14, 1
      %s168 = smul.addr %s167, 4
      %s169 = smul.addr %s168, 8
      %s170 = scalar_lea.vmem %s3, %s169
      %v171 = vld [vmem:[%s165] sm:$0xff]
      %v172 = vld [vmem:[%s165 + $0x8] sm:$0xff]
      %v173 = vld [vmem:[%s165 + $0x10] sm:$0xff]
      %v174 = vld [vmem:[%s165 + $0x18] sm:$0xff]
      %v175 = vld [vmem:[%s165 + $0x20] sm:$0xff]
      %v176 = vld [vmem:[%s165 + $0x28] sm:$0xff]
      %v177 = vld [vmem:[%s165 + $0x30] sm:$0xff]
      %v178 = vld [vmem:[%s165 + $0x38] sm:$0xff]
      %v179 = vld [vmem:[%s165 + $0x40] sm:$0xff]
      %v180 = vld [vmem:[%s165 + $0x48] sm:$0xff]
      %v181 = vld [vmem:[%s165 + $0x50] sm:$0xff]
      %v182 = vld [vmem:[%s165 + $0x58] sm:$0xff]
      %v183 = vld [vmem:[%s165 + $0x60] sm:$0xff]
      %v184 = vld [vmem:[%s165 + $0x68] sm:$0xff]
      %v185 = vld [vmem:[%s165 + $0x70] sm:$0xff]
      %v186 = vld [vmem:[%s165 + $0x78] sm:$0xff]
      %v187 = vld [vmem:[%s165 + $0x80] sm:$0xff]
      %v188 = vld [vmem:[%s165 + $0x88] sm:$0xff]
      %v189 = vld [vmem:[%s165 + $0x90] sm:$0xff]
      %v190 = vld [vmem:[%s165 + $0x98] sm:$0xff]
      %v191 = vld [vmem:[%s165 + $0xa0] sm:$0xff]
      %v192 = vld [vmem:[%s165 + $0xa8] sm:$0xff]
      %v193 = vld [vmem:[%s165 + $0xb0] sm:$0xff]
      %v194 = vld [vmem:[%s165 + $0xb8] sm:$0xff]
      %v195 = vld [vmem:[%s165 + $0xc0] sm:$0xff]
      %v196 = vld [vmem:[%s165 + $0xc8] sm:$0xff]
      %v197 = vld [vmem:[%s165 + $0xd0] sm:$0xff]
      %v198 = vld [vmem:[%s165 + $0xd8] sm:$0xff]
      %v199 = vld [vmem:[%s165 + $0xe0] sm:$0xff]
      %v200 = vld [vmem:[%s165 + $0xe8] sm:$0xff]
      %v201 = vld [vmem:[%s165 + $0xf0] sm:$0xff]
      %v202 = vld [vmem:[%s165 + $0xf8] sm:$0xff]
      %v203 = vld [vmem:[%s165 + $0x100] sm:$0xff]
      %v204 = vld [vmem:[%s165 + $0x108] sm:$0xff]
      %v205 = vld [vmem:[%s165 + $0x110] sm:$0xff]
      %v206 = vld [vmem:[%s165 + $0x118] sm:$0xff]
      %v207 = vld [vmem:[%s165 + $0x120] sm:$0xff]
      %v208 = vld [vmem:[%s165 + $0x128] sm:$0xff]
      %v209 = vld [vmem:[%s165 + $0x130] sm:$0xff]
      %v210 = vld [vmem:[%s165 + $0x138] sm:$0xff]
      %v211 = vld [vmem:[%s165 + $0x140] sm:$0xff]
      %v212 = vld [vmem:[%s165 + $0x148] sm:$0xff]
      %v213 = vld [vmem:[%s165 + $0x150] sm:$0xff]
      %v214 = vld [vmem:[%s165 + $0x158] sm:$0xff]
      %v215 = vld [vmem:[%s165 + $0x160] sm:$0xff]
      %v216 = vld [vmem:[%s165 + $0x168] sm:$0xff]
      %v217 = vld [vmem:[%s165 + $0x170] sm:$0xff]
      %v218 = vld [vmem:[%s165 + $0x178] sm:$0xff]
      %v219 = vld [vmem:[%s165 + $0x180] sm:$0xff]
      %v220 = vld [vmem:[%s165 + $0x188] sm:$0xff]
      %v221 = vld [vmem:[%s165 + $0x190] sm:$0xff]
      %v222 = vld [vmem:[%s165 + $0x198] sm:$0xff]
      %v223 = vld [vmem:[%s165 + $0x1a0] sm:$0xf]
      %v224 = vld [vmem:[%s165 + $0x1a8] sm:$0xf]
      %v225 = vld [vmem:[%s165 + $0x1b0] sm:$0xf]
      %v226 = vld [vmem:[%s165 + $0x1b8] sm:$0xf]
      %v227 = vld [vmem:[%s1] sm:$0xff]
      %v228 = vld [vmem:[%s2] sm:$0xff]
      %230 = vset.pattern.permute.xlu0 0
      %231 = vperm.xlu0 %230, %v228
      %v232 = vpop.permute.xlu0 %231
      %vm234 = vcmask 883712
      %v236 = vsel %vm234, %v227, 0
      %vm238 = vcmask 1043456
      %v240 = vsel %vm238, %v223, 0
      %v243 = vsel %vm238, %v224, 0
      %v246 = vsel %vm238, %v225, 0
      %v249 = vsel %vm238, %v226, 0
      %251 = vmatpush.msra.mxu0 0.0
      %252 = vmatpush.msra.mxu0 0.0
      %253 = vmatpush.msra.mxu0 %v240
      %254 = vmatpush.msra.mxu0 %v219
      %255 = vmatpush.msra.mxu0 %v215
      %256 = vmatpush.msra.mxu0 %v211
      %257 = vmatpush.msra.mxu0 %v207
      %258 = vmatpush.msra.mxu0 %v203
      %259 = vmatpush.msra.mxu0 %v199
      %260 = vmatpush.msra.mxu0 %v195
      %261 = vmatpush.msra.mxu0 %v191
      %262 = vmatpush.msra.mxu0 %v187
      %263 = vmatpush.msra.mxu0 %v183
      %264 = vmatpush.msra.mxu0 %v179
      %265 = vmatpush.msra.mxu0 %v175
      %266 = vmatpush.msra.mxu0 %v171
      %267 = vmatmul.f32.gmra.mxu0 %v236
      %v268 = vpop.f32.mrf.mxu0
      %v269 = vadd.f32 %v232, %v268
      %270 = vdwg.mxu0
      %271 = vmatpush.msra.mxu0 0.0
      %272 = vmatpush.msra.mxu0 0.0
      %273 = vmatpush.msra.mxu0 %v243
      %274 = vmatpush.msra.mxu0 %v220
      %275 = vmatpush.msra.mxu0 %v216
      %276 = vmatpush.msra.mxu0 %v212
      %277 = vmatpush.msra.mxu0 %v208
      %278 = vmatpush.msra.mxu0 %v204
      %279 = vmatpush.msra.mxu0 %v200
      %280 = vmatpush.msra.mxu0 %v196
      %281 = vmatpush.msra.mxu0 %v192
      %282 = vmatpush.msra.mxu0 %v188
      %283 = vmatpush.msra.mxu0 %v184
      %284 = vmatpush.msra.mxu0 %v180
      %285 = vmatpush.msra.mxu0 %v176
      %286 = vmatpush.msra.mxu0 %v172
      %287 = vmatmul.f32.gmra.mxu0 %v236
      %v288 = vpop.f32.mrf.mxu0
      %v289 = vadd.f32 %v232, %v288
      %290 = vdwg.mxu0
      %291 = vmatpush.msra.mxu0 0.0
      %292 = vmatpush.msra.mxu0 0.0
      %293 = vmatpush.msra.mxu0 %v246
      %294 = vmatpush.msra.mxu0 %v221
      %295 = vmatpush.msra.mxu0 %v217
      %296 = vmatpush.msra.mxu0 %v213
      %297 = vmatpush.msra.mxu0 %v209
      %298 = vmatpush.msra.mxu0 %v205
      %299 = vmatpush.msra.mxu0 %v201
      %300 = vmatpush.msra.mxu0 %v197
      %301 = vmatpush.msra.mxu0 %v193
      %302 = vmatpush.msra.mxu0 %v189
      %303 = vmatpush.msra.mxu0 %v185
      %304 = vmatpush.msra.mxu0 %v181
      %305 = vmatpush.msra.mxu0 %v177
      %306 = vmatpush.msra.mxu0 %v173
      %307 = vmatmul.f32.gmra.mxu0 %v236
      %v308 = vpop.f32.mrf.mxu0
      %v309 = vadd.f32 %v232, %v308
      %310 = vdwg.mxu0
      %311 = vmatpush.msra.mxu0 0.0
      %312 = vmatpush.msra.mxu0 0.0
      %313 = vmatpush.msra.mxu0 %v249
      %314 = vmatpush.msra.mxu0 %v222
      %315 = vmatpush.msra.mxu0 %v218
      %316 = vmatpush.msra.mxu0 %v214
      %317 = vmatpush.msra.mxu0 %v210
      %318 = vmatpush.msra.mxu0 %v206
      %319 = vmatpush.msra.mxu0 %v202
      %320 = vmatpush.msra.mxu0 %v198
      %321 = vmatpush.msra.mxu0 %v194
      %322 = vmatpush.msra.mxu0 %v190
      %323 = vmatpush.msra.mxu0 %v186
      %324 = vmatpush.msra.mxu0 %v182
      %325 = vmatpush.msra.mxu0 %v178
      %326 = vmatpush.msra.mxu0 %v174
      %327 = vmatmul.f32.gmra.mxu0 %v236
      %v328 = vpop.f32.mrf.mxu0
      %v329 = vadd.f32 %v232, %v328
      %330 = vdwg.mxu0
      %v331 = vadd.f32 %v269, %v289
      %v332 = vadd.f32 %v331, %v309
      %v333 = vadd.f32 %v332, %v329
      %334 = vadd.xlane.f32.xlu0 %v333
      %v335 = vpop.xlane.xlu0 %334
      %v336 = vrcp.pop 512.0
      %v337 = vmul.f32 512.0, %v336
      %v338 = vsub.f32 1.0, %v337
      %v339 = vmul.f32 %v336, %v338
      %v340 = vadd.f32 %v336, %v339
      %vm341 = vweird.f32 %v336
      %v342 = vsel %vm341, %v336, %v340
      %v343 = vmul.f32 %v335, %v342
      %v344 = vsub.f32 %v269, %v343
      %v345 = vsub.f32 %v289, %v343
      %v346 = vsub.f32 %v309, %v343
      %v347 = vsub.f32 %v329, %v343
      %v348 = vmul.f32 %v344, %v344
      %v349 = vmul.f32 %v345, %v345
      %v350 = vmul.f32 %v346, %v346
      %v351 = vmul.f32 %v347, %v347
      %v352 = vadd.f32 %v348, %v349
      %v353 = vadd.f32 %v352, %v350
      %v354 = vadd.f32 %v353, %v351
      %355 = vadd.xlane.f32.xlu0 %v354
      %v356 = vpop.xlane.xlu0 %355
      %v357 = vmul.f32 %v356, %v342
      %v358 = vadd.f32 %v357, 1e-05
      %v359 = vrsqrt.pop %v358
      %v360 = vmul.f32 %v359, %v358
      %v361 = vmul.f32 %v360, %v359
      %v362 = vmul.f32 0.5, %v361
      %v363 = vsub.f32 1.5, %v362
      %v364 = vmul.f32 %v359, %v363
      %vm365 = vweird.f32 %v358
      %vm366 = vweird.f32 %v359
      %vm367 = vmor %vm365, %vm366
      %v368 = vsel %vm367, %v359, %v364
      %v369 = vmul.f32 %v344, %v368
      %v370 = vmul.f32 %v345, %v368
      %v371 = vmul.f32 %v346, %v368
      %v372 = vmul.f32 %v347, %v368
      %vm373 = vcmp.ge.f32.partialorder %v369, 0.0
      %vm374 = vcmp.ge.f32.partialorder %v370, 0.0
      %vm375 = vcmp.ge.f32.partialorder %v371, 0.0
      %vm376 = vcmp.ge.f32.partialorder %v372, 0.0
      %v377 = vmul.f32 %v369, 0.01
      %v378 = vmul.f32 %v370, 0.01
      %v379 = vmul.f32 %v371, 0.01
      %v380 = vmul.f32 %v372, 0.01
      %v381 = vsel %vm373, %v369, %v377
      %v382 = vsel %vm374, %v370, %v378
      %v383 = vsel %vm375, %v371, %v379
      %v384 = vsel %vm376, %v372, %v380
      %385 = vst [vmem:[%s170] sm:$0xff] %v381
      %386 = vst [vmem:[%s170 + $0x8] sm:$0xff] %v382
      %387 = vst [vmem:[%s170 + $0x10] sm:$0xff] %v383
      %388 = vst [vmem:[%s170 + $0x18] sm:$0xff] %v384
      %p389 = scmp.lt.s32.totalorder %s14, 1
      %s390 = scalar_select %p389, %s14, 1
      %s391 = smul.addr %s390, 4
      %s392 = smul.addr %s391, 8
      %s393 = scalar_lea.vmem %s3, %s392
      // Predicated region
      $region33: #{conv_block_stack.2} parent=31 // pred_check
        %p394 = pneg %p100
      $region34: #{conv_block_stack.2} parent=31 // pred_check_branch
        %396 = sbr.rel (%p394) target = $region36
      $region35: #{conv_block_stack.2} parent=31 // pred_region
        _
      $region36: #{conv_block_stack.2} parent=31 // pred_fallthru
        _
    $region32: #{conv_block_stack.2} parent=5 // pred_fallthru
      _
    %p397 = scmp.le.s32.totalorder 2, %s9
    // Predicated region
    $region37: #{conv_block_stack.2} parent=5 // pred_check
      %p398 = pneg %p397
    $region38: #{conv_block_stack.2} parent=5 // pred_check_branch
      %400 = sbr.rel (%p398) target = $region40
    $region39: #{conv_block_stack.2} parent=5 // pred_region
      %s401 = ssub.s32 %s9, 2
      // Predicated region
      $region41: #{conv_block_stack.2} parent=39 // pred_check
        %p402 = pneg %p106
      $region42: #{conv_block_stack.2} parent=39 // pred_check_branch
        %404 = sbr.rel (%p402) target = $region44
      $region43: #{conv_block_stack.2} parent=39 // pred_region
        %p405 = scmp.lt.s32.totalorder %s15, 1
        %s406 = scalar_select %p405, %s15, 1
        %s407 = smul.addr %s406, 4
        %s408 = smul.addr %s407, 8
        %s409 = scalar_lea.vmem %s3, %s408
      $region44: #{conv_block_stack.2} parent=39 // pred_fallthru
        _
    $region40: #{conv_block_stack.2} parent=5 // pred_fallthru
      _
  $region6: #{conv_block_stack.2} parent=0 // loop_footer
    %s13 = sadd.s32 1, %s9
  $region7: #{conv_block_stack.2} parent=0 // loop_footer_branch
    %8 = sbr.rel target = $region3
  $region8: #{conv_block_stack.2} parent=0 // loop_exit
    _

// kernel: conv_block_stack.3
$region0: #{conv_block_stack.3}
  #allocation0 [shape = 'u32[]', space=smem, size = 0x4, offset = 0x4, fixed_abs, tag = 'smem constant byte address 0x4 - core index']
  #allocation1 [shape = 'u32[72,128]{1,0:T(1,128)}', space=vmem, size = 0x9000, scoped, tag = 'internal scratch']
  %s0 = inlined_call_operand.vmem [shape: f32[2,216,512], index: 0, kind: input, shape index: {}]
  %s1 = inlined_call_operand.vmem [shape: f32[8,216], index: 1, kind: input, shape index: {}]
  %s2 = inlined_call_operand.vmem [shape: f32[8,1], index: 2, kind: input, shape index: {}]
  %s3 = inlined_call_operand.vmem [shape: f32[2,8,512], index: 3, kind: output, shape index: {}]
  %s4 = sld [smem:[#allocation0]]
  $region45: #{conv_block_stack.3} parent=0
    _
  %s6 = ssub.s32 1, %s4
  %s7 = scalar_select 0, %s6, %s4
  loop: start=0, step=1, limit=4
  $region2: #{conv_block_stack.3} parent=0 // loop_pre_header
    _
  $region3: #{conv_block_stack.3} parent=0 // loop_header
    %s9 = sphi 0, %s13
    %p10 = scmp.ge.s32.totalorder %s9, 4
    %s19 = sphi 0, %s21
    %s22 = sphi 0, %s19
    %s23 = sphi 0, %s22
    %s39 = sphi 0, %s23
    %s43 = sphi 0, %s43
    %s45 = sphi 0, %s43
    %s46 = sphi 0, %s45
    %s60 = sphi 0, %s46
    %s64 = sphi 0, %s64
    %s66 = sphi 0, %s64
    %s67 = sphi 0, %s66
    %s81 = sphi 0, %s67
    %s87 = sphi 0, %s89
    %s90 = sphi 0, %s87
    %s91 = sphi 0, %s90
    %s107 = sphi 0, %s91
  $region4: #{conv_block_stack.3} parent=0 // loop_header_branch
    %12 = sbr.rel (%p10) target = $region8
  $region5: #{conv_block_stack.3} parent=0 // loop_body
    %s14 = ssub.s32 %s9, 1
    %s15 = ssub.s32 %s9, 2
    %s16 = sadd.s32 %s9, 1
    %s17 = ssub.s32 %s9, %s16
    %p18 = scmp.eq.s32.totalorder %s17, 0
    %s20 = sadd.s32 %s19, 1
    %s21 = scalar_select %p18, %s19, %s20
    %p24 = pneg %p18
    %p25 = scmp.eq.s32.totalorder %s9, 1
    %p26 = por %p24, %p25
    %p27 = scmp.ne.s32.totalorder %s19, %s22
    %p28 = scmp.eq.s32.totalorder %s9, 0
    %p29 = por %p27, %p28
    %p30 = scmp.ne.s32.totalorder %s19, %s22
    %p31 = scmp.eq.s32.totalorder %s14, 1
    %p32 = por %p30, %p31
    %p33 = scmp.ne.s32.totalorder %s22, %s23
    %p34 = scmp.eq.s32.totalorder %s14, 0
    %p35 = por %p33, %p34
    %p36 = scmp.ne.s32.totalorder %s22, %s23
    %p37 = scmp.eq.s32.totalorder %s15, 1
    %p38 = por %p36, %p37
    %p40 = scmp.ne.s32.totalorder %s23, %s39
    %p41 = scmp.eq.s32.totalorder %s15, 0
    %p42 = por %p40, %p41
    %s44 = sadd.s32 %s43, 1
    %p47 = scmp.eq.s32.totalorder %s9, 1
    %p48 = scmp.ne.s32.totalorder %s43, %s45
    %p49 = scmp.eq.s32.totalorder %s9, 0
    %p50 = por %p48, %p49
    %p51 = scmp.ne.s32.totalorder %s43, %s45
    %p52 = scmp.eq.s32.totalorder %s14, 1
    %p53 = por %p51, %p52
    %p54 = scmp.ne.s32.totalorder %s45, %s46
    %p55 = scmp.eq.s32.totalorder %s14, 0
    %p56 = por %p54, %p55
    %p57 = scmp.ne.s32.totalorder %s45, %s46
    %p58 = scmp.eq.s32.totalorder %s15, 1
    %p59 = por %p57, %p58
    %p61 = scmp.ne.s32.totalorder %s46, %s60
    %p62 = scmp.eq.s32.totalorder %s15, 0
    %p63 = por %p61, %p62
    %s65 = sadd.s32 %s64, 1
    %p68 = scmp.eq.s32.totalorder %s9, 1
    %p69 = scmp.ne.s32.totalorder %s64, %s66
    %p70 = scmp.eq.s32.totalorder %s9, 0
    %p71 = por %p69, %p70
    %p72 = scmp.ne.s32.totalorder %s64, %s66
    %p73 = scmp.eq.s32.totalorder %s14, 1
    %p74 = por %p72, %p73
    %p75 = scmp.ne.s32.totalorder %s66, %s67
    %p76 = scmp.eq.s32.totalorder %s14, 0
    %p77 = por %p75, %p76
    %p78 = scmp.ne.s32.totalorder %s66, %s67
    %p79 = scmp.eq.s32.totalorder %s15, 1
    %p80 = por %p78, %p79
    %p82 = scmp.ne.s32.totalorder %s67, %s81
    %p83 = scmp.eq.s32.totalorder %s15, 0
    %p84 = por %p82, %p83
    %s85 = ssub.s32 %s9, %s16
    %p86 = scmp.eq.s32.totalorder %s85, 0
    %s88 = sadd.s32 %s87, 1
    %s89 = scalar_select %p86, %s87, %s88
    %p92 = pneg %p86
    %p93 = scmp.eq.s32.totalorder %s9, 1
    %p94 = por %p92, %p93
    %p95 = scmp.ne.s32.totalorder %s87, %s90
    %p96 = scmp.eq.s32.totalorder %s9, 0
    %p97 = por %p95, %p96
    %p98 = scmp.ne.s32.totalorder %s87, %s90
    %p99 = scmp.eq.s32.totalorder %s14, 1
    %p100 = por %p98, %p99
    %p101 = scmp.ne.s32.totalorder %s90, %s91
    %p102 = scmp.eq.s32.totalorder %s14, 0
    %p103 = por %p101, %p102
    %p104 = scmp.ne.s32.totalorder %s90, %s91
    %p105 = scmp.eq.s32.totalorder %s15, 1
    %p106 = por %p104, %p105
    %p108 = scmp.ne.s32.totalorder %s91, %s107
    %p109 = scmp.eq.s32.totalorder %s15, 0
    %p110 = por %p108, %p109
    %p111 = scmp.le.s32.totalorder 1, %s9
    %p112 = scmp.lt.s32.totalorder %s9, 3
    %p113 = pnand %p111, %p112
    %p114 = pneg %p113
    // Predicated region
    $region9: #{conv_block_stack.3} parent=5 // pred_check
      _
    $region10: #{conv_block_stack.3} parent=5 // pred_check_branch
      %116 = sbr.rel (%p113) target = $region12
    $region11: #{conv_block_stack.3} parent=5 // pred_region
      %s117 = ssub.s32 %s9, 1
      // Predicated region
      $region13: #{conv_block_stack.3} parent=11 // pred_check
        %p118 = pneg %p56
      $region14: #{conv_block_stack.3} parent=11 // pred_check_branch
        %120 = sbr.rel (%p118) target = $region16
      $region15: #{conv_block_stack.3} parent=11 // pred_region
        _
      $region16: #{conv_block_stack.3} parent=11 // pred_fallthru
        _
      // Predicated region
      $region17: #{conv_block_stack.3} parent=11 // pred_check
        %p121 = pneg %p77
      $region18: #{conv_block_stack.3} parent=11 // pred_check_branch
        %123 = sbr.rel (%p121) target = $region20
      $region19: #{conv_block_stack.3} parent=11 // pred_region
        _
      $region20: #{conv_block_stack.3} parent=11 // pred_fallthru
        _
    $region12: #{conv_block_stack.3} parent=5 // pred_fallthru
      _
    %p124 = scmp.lt.s32.totalorder %s9, 2
    // Predicated region
    $region21: #{conv_block_stack.3} parent=5 // pred_check
      %p125 = pneg %p124
    $region22: #{conv_block_stack.3} parent=5 // pred_check_branch
      %127 = sbr.rel (%p125) target = $region24
    $region23: #{conv_block_stack.3} parent=5 // pred_region
      // Predicated region
      $region25: #{conv_block_stack.3} parent=23 // pred_check
        %p128 = pneg %p29
      $region26: #{conv_block_stack.3} parent=23 // pred_check_branch
        %130 = sbr.rel (%p128) target = $region28
      $region27: #{conv_block_stack.3} parent=23 // pred_region
        %p131 = scmp.lt.s32.totalorder %s9, 1
        %s132 = scalar_select %p131, %s9, 1
        %s133 = smul.addr %s132, 108
        %s134 = smul.addr %s133, 8
        %s135 = scalar_lea.vmem %s0, %s134
      $region28: #{conv_block_stack.3} parent=23 // pred_fallthru
        _
    $region24: #{conv_block_stack.3} parent=5 // pred_fallthru
      _
    %p136 = scmp.le.s32.totalorder 1, %s9
    %p137 = scmp.lt.s32.totalorder %s9, 3
    %p138 = pnand %p136, %p137
    %p139 = pneg %p138
    // Predicated region
    $region29: #{conv_block_stack.3} parent=5 // pred_check
      _
    $region30: #{conv_block_stack.3} parent=5 // pred_check_branch
      %141 = sbr.rel (%p138) target = $region32
    $region31: #{conv_block_stack.3} parent=5 // pred_region
      %s142 = ssub.s32 %s9, 1
      %p143 = scmp.lt.s32.totalorder %s14, 1
      %s144 = scalar_select %p143, %s14, 1
      %s145 = smul.addr %s144, 108
      %s146 = smul.addr %s145, 8
      %s147 = scalar_lea.vmem %s0, %s146
      %p148 = pneg %p35
      %p149 = pneg %p32
      %p150 = pneg %p56
      %p151 = pneg %p53
      %p152 = pneg %p77
      %p153 = pneg %p74
      %p154 = pneg %p103
      %p155 = pneg %p100
      %p156 = scmp.lt.s32.totalorder %s14, 1
      %s157 = scalar_select %p156, %s14, 1
      %s158 = smul.addr %s157, 4
      %s159 = smul.addr %s158, 8
      %s160 = scalar_lea.vmem %s3, %s159
      %p161 = scmp.lt.s32.totalorder %s14, 1
      %s162 = scalar_select %p161, %s14, 1
      %s163 = smul.addr %s162, 108
      %s164 = smul.addr %s163, 8
      %s165 = scalar_lea.vmem %s0, %s164
      %p166 = scmp.lt.s32.totalorder %s14, 1
      %s167 = scalar_select %p166, %s14, 1
      %s168 = smul.addr %s167, 4
      %s169 = smul.addr %s168, 8
      %s170 = scalar_lea.vmem %s3, %s169
      %v171 = vld [vmem:[%s165] sm:$0xff]
      %v172 = vld [vmem:[%s165 + $0x8] sm:$0xff]
      %v173 = vld [vmem:[%s165 + $0x10] sm:$0xff]
      %v174 = vld [vmem:[%s165 + $0x18] sm:$0xff]
      %v175 = vld [vmem:[%s165 + $0x20] sm:$0xff]
      %v176 = vld [vmem:[%s165 + $0x28] sm:$0xff]
      %v177 = vld [vmem:[%s165 + $0x30] sm:$0xff]
      %v178 = vld [vmem:[%s165 + $0x38] sm:$0xff]
      %v179 = vld [vmem:[%s165 + $0x40] sm:$0xff]
      %v180 = vld [vmem:[%s165 + $0x48] sm:$0xff]
      %v181 = vld [vmem:[%s165 + $0x50] sm:$0xff]
      %v182 = vld [vmem:[%s165 + $0x58] sm:$0xff]
      %v183 = vld [vmem:[%s165 + $0x60] sm:$0xff]
      %v184 = vld [vmem:[%s165 + $0x68] sm:$0xff]
      %v185 = vld [vmem:[%s165 + $0x70] sm:$0xff]
      %v186 = vld [vmem:[%s165 + $0x78] sm:$0xff]
      %v187 = vld [vmem:[%s165 + $0x80] sm:$0xff]
      %v188 = vld [vmem:[%s165 + $0x88] sm:$0xff]
      %v189 = vld [vmem:[%s165 + $0x90] sm:$0xff]
      %v190 = vld [vmem:[%s165 + $0x98] sm:$0xff]
      %v191 = vld [vmem:[%s165 + $0xa0] sm:$0xff]
      %v192 = vld [vmem:[%s165 + $0xa8] sm:$0xff]
      %v193 = vld [vmem:[%s165 + $0xb0] sm:$0xff]
      %v194 = vld [vmem:[%s165 + $0xb8] sm:$0xff]
      %v195 = vld [vmem:[%s165 + $0xc0] sm:$0xff]
      %v196 = vld [vmem:[%s165 + $0xc8] sm:$0xff]
      %v197 = vld [vmem:[%s165 + $0xd0] sm:$0xff]
      %v198 = vld [vmem:[%s165 + $0xd8] sm:$0xff]
      %v199 = vld [vmem:[%s165 + $0xe0] sm:$0xff]
      %v200 = vld [vmem:[%s165 + $0xe8] sm:$0xff]
      %v201 = vld [vmem:[%s165 + $0xf0] sm:$0xff]
      %v202 = vld [vmem:[%s165 + $0xf8] sm:$0xff]
      %v203 = vld [vmem:[%s165 + $0x100] sm:$0xff]
      %v204 = vld [vmem:[%s165 + $0x108] sm:$0xff]
      %v205 = vld [vmem:[%s165 + $0x110] sm:$0xff]
      %v206 = vld [vmem:[%s165 + $0x118] sm:$0xff]
      %v207 = vld [vmem:[%s165 + $0x120] sm:$0xff]
      %v208 = vld [vmem:[%s165 + $0x128] sm:$0xff]
      %v209 = vld [vmem:[%s165 + $0x130] sm:$0xff]
      %v210 = vld [vmem:[%s165 + $0x138] sm:$0xff]
      %v211 = vld [vmem:[%s165 + $0x140] sm:$0xff]
      %v212 = vld [vmem:[%s165 + $0x148] sm:$0xff]
      %v213 = vld [vmem:[%s165 + $0x150] sm:$0xff]
      %v214 = vld [vmem:[%s165 + $0x158] sm:$0xff]
      %v215 = vld [vmem:[%s165 + $0x160] sm:$0xff]
      %v216 = vld [vmem:[%s165 + $0x168] sm:$0xff]
      %v217 = vld [vmem:[%s165 + $0x170] sm:$0xff]
      %v218 = vld [vmem:[%s165 + $0x178] sm:$0xff]
      %v219 = vld [vmem:[%s165 + $0x180] sm:$0xff]
      %v220 = vld [vmem:[%s165 + $0x188] sm:$0xff]
      %v221 = vld [vmem:[%s165 + $0x190] sm:$0xff]
      %v222 = vld [vmem:[%s165 + $0x198] sm:$0xff]
      %v223 = vld [vmem:[%s165 + $0x1a0] sm:$0xff]
      %v224 = vld [vmem:[%s165 + $0x1a8] sm:$0xff]
      %v225 = vld [vmem:[%s165 + $0x1b0] sm:$0xff]
      %v226 = vld [vmem:[%s165 + $0x1b8] sm:$0xff]
      %v227 = vld [vmem:[%s165 + $0x1c0] sm:$0xff]
      %v228 = vld [vmem:[%s165 + $0x1c8] sm:$0xff]
      %v229 = vld [vmem:[%s165 + $0x1d0] sm:$0xff]
      %v230 = vld [vmem:[%s165 + $0x1d8] sm:$0xff]
      %v231 = vld [vmem:[%s165 + $0x1e0] sm:$0xff]
      %v232 = vld [vmem:[%s165 + $0x1e8] sm:$0xff]
      %v233 = vld [vmem:[%s165 + $0x1f0] sm:$0xff]
      %v234 = vld [vmem:[%s165 + $0x1f8] sm:$0xff]
      %v235 = vld [vmem:[%s165 + $0x200] sm:$0xff]
      %v236 = vld [vmem:[%s165 + $0x208] sm:$0xff]
      %v237 = vld [vmem:[%s165 + $0x210] sm:$0xff]
      %v238 = vld [vmem:[%s165 + $0x218] sm:$0xff]
      %v239 = vld [vmem:[%s165 + $0x220] sm:$0xff]
      %v240 = vld [vmem:[%s165 + $0x228] sm:$0xff]
      %v241 = vld [vmem:[%s165 + $0x230] sm:$0xff]
      %v242 = vld [vmem:[%s165 + $0x238] sm:$0xff]
      %v243 = vld [vmem:[%s165 + $0x240] sm:$0xff]
      %v244 = vld [vmem:[%s165 + $0x248] sm:$0xff]
      %v245 = vld [vmem:[%s165 + $0x250] sm:$0xff]
      %v246 = vld [vmem:[%s165 + $0x258] sm:$0xff]
      %v247 = vld [vmem:[%s165 + $0x260] sm:$0xff]
      %v248 = vld [vmem:[%s165 + $0x268] sm:$0xff]
      %v249 = vld [vmem:[%s165 + $0x270] sm:$0xff]
      %v250 = vld [vmem:[%s165 + $0x278] sm:$0xff]
      %v251 = vld [vmem:[%s165 + $0x280] sm:$0xff]
      %v252 = vld [vmem:[%s165 + $0x288] sm:$0xff]
      %v253 = vld [vmem:[%s165 + $0x290] sm:$0xff]
      %v254 = vld [vmem:[%s165 + $0x298] sm:$0xff]
      %v255 = vld [vmem:[%s165 + $0x2a0] sm:$0xff]
      %v256 = vld [vmem:[%s165 + $0x2a8] sm:$0xff]
      %v257 = vld [vmem:[%s165 + $0x2b0] sm:$0xff]
      %v258 = vld [vmem:[%s165 + $0x2b8] sm:$0xff]
      %v259 = vld [vmem:[%s165 + $0x2c0] sm:$0xff]
      %v260 = vld [vmem:[%s165 + $0x2c8] sm:$0xff]
      %v261 = vld [vmem:[%s165 + $0x2d0] sm:$0xff]
      %v262 = vld [vmem:[%s165 + $0x2d8] sm:$0xff]
      %v263 = vld [vmem:[%s165 + $0x2e0] sm:$0xff]
      %v264 = vld [vmem:[%s165 + $0x2e8] sm:$0xff]
      %v265 = vld [vmem:[%s165 + $0x2f0] sm:$0xff]
      %v266 = vld [vmem:[%s165 + $0x2f8] sm:$0xff]
      %v267 = vld [vmem:[%s165 + $0x300] sm:$0xff]
      %v268 = vld [vmem:[%s165 + $0x308] sm:$0xff]
      %v269 = vld [vmem:[%s165 + $0x310] sm:$0xff]
      %v270 = vld [vmem:[%s165 + $0x318] sm:$0xff]
      %v271 = vld [vmem:[%s165 + $0x320] sm:$0xff]
      %v272 = vld [vmem:[%s165 + $0x328] sm:$0xff]
      %v273 = vld [vmem:[%s165 + $0x330] sm:$0xff]
      %v274 = vld [vmem:[%s165 + $0x338] sm:$0xff]
      %v275 = vld [vmem:[%s165 + $0x340] sm:$0xff]
      %v276 = vld [vmem:[%s165 + $0x348] sm:$0xff]
      %v277 = vld [vmem:[%s165 + $0x350] sm:$0xff]
      %v278 = vld [vmem:[%s165 + $0x358] sm:$0xff]
      %v279 = vld [vmem:[%s1] sm:$0xff]
      %v280 = vld [vmem:[%s1 + $0x8] sm:$0xff]
      %v281 = vld [vmem:[%s2] sm:$0xff]
      %283 = vset.pattern.permute.xlu0 0
      %284 = vperm.xlu0 %283, %v281
      %v285 = vpop.permute.xlu0 %284
      %vm287 = vcmask 719872
      %v289 = vsel %vm287, %v280, 0
      %291 = vmatpush.msra.mxu0 %v231
      %292 = vmatpush.msra.mxu0 %v227
      %293 = vmatpush.msra.mxu0 %v223
      %294 = vmatpush.msra.mxu0 %v219
      %295 = vmatpush.msra.mxu0 %v215
      %296 = vmatpush.msra.mxu0 %v211
      %297 = vmatpush.msra.mxu0 %v207
      %298 = vmatpush.msra.mxu0 %v203
      %299 = vmatpush.msra.mxu0 %v199
      %300 = vmatpush.msra.mxu0 %v195
      %301 = vmatpush.msra.mxu0 %v191
      %302 = vmatpush.msra.mxu0 %v187
      %303 = vmatpush.msra.mxu0 %v183
      %304 = vmatpush.msra.mxu0 %v179
      %305 = vmatpush.msra.mxu0 %v175
      %306 = vmatpush.msra.mxu0 %v171
      %307 = vmatmul.f32.gmra.mxu0 %v279
      %v308 = vpop.f32.mrf.mxu0
      %v309 = vadd.f32 %v285, %v308
      %310 = vdwg.mxu0
      %311 = vmatpush.msra.mxu0 0.0
      %312 = vmatpush.msra.mxu0 0.0
      %313 = vmatpush.msra.mxu0 0.0
      %314 = vmatpush.msra.mxu0 0.0
      %315 = vmatpush.msra.mxu0 0.0
      %316 = vmatpush.msra.mxu0 %v275
      %317 = vmatpush.msra.mxu0 %v271
      %318 = vmatpush.msra.mxu0 %v267
      %319 = vmatpush.msra.mxu0 %v263
      %320 = vmatpush.msra.mxu0 %v259
      %321 = vmatpush.msra.mxu0 %v255
      %322 = vmatpush.msra.mxu0 %v251
      %323 = vmatpush.msra.mxu0 %v247
      %324 = vmatpush.msra.mxu0 %v243
      %325 = vmatpush.msra.mxu0 %v239
      %326 = vmatpush.msra.mxu0 %v235
      %327 = vmatmul.f32.gmra.mxu0 %v289
      %v328 = vpop.f32.mrf.mxu0
      %v329 = vadd.f32 %v309, %v328
      %330 = vdwg.mxu0
      %331 = vmatpush.msra.mxu0 %v232
      %332 = vmatpush.msra.mxu0 %v228
      %333 = vmatpush.msra.mxu0 %v224
      %334 = vmatpush.msra.mxu0 %v220
      %335 = vmatpush.msra.mxu0 %v216
      %336 = vmatpush.msra.mxu0 %v212
      %337 = vmatpush.msra.mxu0 %v208
      %338 = vmatpush.msra.mxu0 %v204
      %339 = vmatpush.msra.mxu0 %v200
      %340 = vmatpush.msra.mxu0 %v196
      %341 = vmatpush.msra.mxu0 %v192
      %342 = vmatpush.msra.mxu0 %v188
      %343 = vmatpush.msra.mxu0 %v184
      %344 = vmatpush.msra.mxu0 %v180
      %345 = vmatpush.msra.mxu0 %v176
      %346 = vmatpush.msra.mxu0 %v172
      %347 = vmatmul.f32.gmra.mxu0 %v279
      %v348 = vpop.f32.mrf.mxu0
      %v349 = vadd.f32 %v285, %v348
      %350 = vdwg.mxu0
      %351 = vmatpush.msra.mxu0 0.0
      %352 = vmatpush.msra.mxu0 0.0
      %353 = vmatpush.msra.mxu0 0.0
      %354 = vmatpush.msra.mxu0 0.0
      %355 = vmatpush.msra.mxu0 0.0
      %356 = vmatpush.msra.mxu0 %v276
      %357 = vmatpush.msra.mxu0 %v272
      %358 = vmatpush.msra.mxu0 %v268
      %359 = vmatpush.msra.mxu0 %v264
      %360 = vmatpush.msra.mxu0 %v260
      %361 = vmatpush.msra.mxu0 %v256
      %362 = vmatpush.msra.mxu0 %v252
      %363 = vmatpush.msra.mxu0 %v248
      %364 = vmatpush.msra.mxu0 %v244
      %365 = vmatpush.msra.mxu0 %v240
      %366 = vmatpush.msra.mxu0 %v236
      %367 = vmatmul.f32.gmra.mxu0 %v289
      %v368 = vpop.f32.mrf.mxu0
      %v369 = vadd.f32 %v349, %v368
      %370 = vdwg.mxu0
      %371 = vmatpush.msra.mxu0 %v233
      %372 = vmatpush.msra.mxu0 %v229
      %373 = vmatpush.msra.mxu0 %v225
      %374 = vmatpush.msra.mxu0 %v221
      %375 = vmatpush.msra.mxu0 %v217
      %376 = vmatpush.msra.mxu0 %v213
      %377 = vmatpush.msra.mxu0 %v209
      %378 = vmatpush.msra.mxu0 %v205
      %379 = vmatpush.msra.mxu0 %v201
      %380 = vmatpush.msra.mxu0 %v197
      %381 = vmatpush.msra.mxu0 %v193
      %382 = vmatpush.msra.mxu0 %v189
      %383 = vmatpush.msra.mxu0 %v185
      %384 = vmatpush.msra.mxu0 %v181
      %385 = vmatpush.msra.mxu0 %v177
      %386 = vmatpush.msra.mxu0 %v173
      %387 = vmatmul.f32.gmra.mxu0 %v279
      %v388 = vpop.f32.mrf.mxu0
      %v389 = vadd.f32 %v285, %v388
      %390 = vdwg.mxu0
      %391 = vmatpush.msra.mxu0 0.0
      %392 = vmatpush.msra.mxu0 0.0
      %393 = vmatpush.msra.mxu0 0.0
      %394 = vmatpush.msra.mxu0 0.0
      %395 = vmatpush.msra.mxu0 0.0
      %396 = vmatpush.msra.mxu0 %v277
      %397 = vmatpush.msra.mxu0 %v273
      %398 = vmatpush.msra.mxu0 %v269
      %399 = vmatpush.msra.mxu0 %v265
      %400 = vmatpush.msra.mxu0 %v261
      %401 = vmatpush.msra.mxu0 %v257
      %402 = vmatpush.msra.mxu0 %v253
      %403 = vmatpush.msra.mxu0 %v249
      %404 = vmatpush.msra.mxu0 %v245
      %405 = vmatpush.msra.mxu0 %v241
      %406 = vmatpush.msra.mxu0 %v237
      %407 = vmatmul.f32.gmra.mxu0 %v289
      %v408 = vpop.f32.mrf.mxu0
      %v409 = vadd.f32 %v389, %v408
      %410 = vdwg.mxu0
      %411 = vmatpush.msra.mxu0 %v234
      %412 = vmatpush.msra.mxu0 %v230
      %413 = vmatpush.msra.mxu0 %v226
      %414 = vmatpush.msra.mxu0 %v222
      %415 = vmatpush.msra.mxu0 %v218
      %416 = vmatpush.msra.mxu0 %v214
      %417 = vmatpush.msra.mxu0 %v210
      %418 = vmatpush.msra.mxu0 %v206
      %419 = vmatpush.msra.mxu0 %v202
      %420 = vmatpush.msra.mxu0 %v198
      %421 = vmatpush.msra.mxu0 %v194
      %422 = vmatpush.msra.mxu0 %v190
      %423 = vmatpush.msra.mxu0 %v186
      %424 = vmatpush.msra.mxu0 %v182
      %425 = vmatpush.msra.mxu0 %v178
      %426 = vmatpush.msra.mxu0 %v174
      %427 = vmatmul.f32.gmra.mxu0 %v279
      %v428 = vpop.f32.mrf.mxu0
      %v429 = vadd.f32 %v285, %v428
      %430 = vdwg.mxu0
      %431 = vmatpush.msra.mxu0 0.0
      %432 = vmatpush.msra.mxu0 0.0
      %433 = vmatpush.msra.mxu0 0.0
      %434 = vmatpush.msra.mxu0 0.0
      %435 = vmatpush.msra.mxu0 0.0
      %436 = vmatpush.msra.mxu0 %v278
      %437 = vmatpush.msra.mxu0 %v274
      %438 = vmatpush.msra.mxu0 %v270
      %439 = vmatpush.msra.mxu0 %v266
      %440 = vmatpush.msra.mxu0 %v262
      %441 = vmatpush.msra.mxu0 %v258
      %442 = vmatpush.msra.mxu0 %v254
      %443 = vmatpush.msra.mxu0 %v250
      %444 = vmatpush.msra.mxu0 %v246
      %445 = vmatpush.msra.mxu0 %v242
      %446 = vmatpush.msra.mxu0 %v238
      %447 = vmatmul.f32.gmra.mxu0 %v289
      %v448 = vpop.f32.mrf.mxu0
      %v449 = vadd.f32 %v429, %v448
      %450 = vdwg.mxu0
      %v451 = vadd.f32 %v329, %v369
      %v452 = vadd.f32 %v451, %v409
      %v453 = vadd.f32 %v452, %v449
      %454 = vadd.xlane.f32.xlu0 %v453
      %v455 = vpop.xlane.xlu0 %454
      %v456 = vrcp.pop 512.0
      %v457 = vmul.f32 512.0, %v456
      %v458 = vsub.f32 1.0, %v457
      %v459 = vmul.f32 %v456, %v458
      %v460 = vadd.f32 %v456, %v459
      %vm461 = vweird.f32 %v456
      %v462 = vsel %vm461, %v456, %v460
      %v463 = vmul.f32 %v455, %v462
      %v464 = vsub.f32 %v329, %v463
      %v465 = vsub.f32 %v369, %v463
      %v466 = vsub.f32 %v409, %v463
      %v467 = vsub.f32 %v449, %v463
      %v468 = vmul.f32 %v464, %v464
      %v469 = vmul.f32 %v465, %v465
      %v470 = vmul.f32 %v466, %v466
      %v471 = vmul.f32 %v467, %v467
      %v472 = vadd.f32 %v468, %v469
      %v473 = vadd.f32 %v472, %v470
      %v474 = vadd.f32 %v473, %v471
      %475 = vadd.xlane.f32.xlu0 %v474
      %v476 = vpop.xlane.xlu0 %475
      %v477 = vmul.f32 %v476, %v462
      %v478 = vadd.f32 %v477, 1e-05
      %v479 = vrsqrt.pop %v478
      %v480 = vmul.f32 %v479, %v478
      %v481 = vmul.f32 %v480, %v479
      %v482 = vmul.f32 0.5, %v481
      %v483 = vsub.f32 1.5, %v482
      %v484 = vmul.f32 %v479, %v483
      %vm485 = vweird.f32 %v478
      %vm486 = vweird.f32 %v479
      %vm487 = vmor %vm485, %vm486
      %v488 = vsel %vm487, %v479, %v484
      %v489 = vmul.f32 %v464, %v488
      %v490 = vmul.f32 %v465, %v488
      %v491 = vmul.f32 %v466, %v488
      %v492 = vmul.f32 %v467, %v488
      %vm493 = vcmp.ge.f32.partialorder %v489, 0.0
      %vm494 = vcmp.ge.f32.partialorder %v490, 0.0
      %vm495 = vcmp.ge.f32.partialorder %v491, 0.0
      %vm496 = vcmp.ge.f32.partialorder %v492, 0.0
      %v497 = vmul.f32 %v489, 0.01
      %v498 = vmul.f32 %v490, 0.01
      %v499 = vmul.f32 %v491, 0.01
      %v500 = vmul.f32 %v492, 0.01
      %v501 = vsel %vm493, %v489, %v497
      %v502 = vsel %vm494, %v490, %v498
      %v503 = vsel %vm495, %v491, %v499
      %v504 = vsel %vm496, %v492, %v500
      %505 = vst [vmem:[%s170] sm:$0xff] %v501
      %506 = vst [vmem:[%s170 + $0x8] sm:$0xff] %v502
      %507 = vst [vmem:[%s170 + $0x10] sm:$0xff] %v503
      %508 = vst [vmem:[%s170 + $0x18] sm:$0xff] %v504
      %p509 = scmp.lt.s32.totalorder %s14, 1
      %s510 = scalar_select %p509, %s14, 1
      %s511 = smul.addr %s510, 4
      %s512 = smul.addr %s511, 8
      %s513 = scalar_lea.vmem %s3, %s512
      // Predicated region
      $region33: #{conv_block_stack.3} parent=31 // pred_check
        %p514 = pneg %p100
      $region34: #{conv_block_stack.3} parent=31 // pred_check_branch
        %516 = sbr.rel (%p514) target = $region36
      $region35: #{conv_block_stack.3} parent=31 // pred_region
        _
      $region36: #{conv_block_stack.3} parent=31 // pred_fallthru
        _
    $region32: #{conv_block_stack.3} parent=5 // pred_fallthru
      _
    %p517 = scmp.le.s32.totalorder 2, %s9
    // Predicated region
    $region37: #{conv_block_stack.3} parent=5 // pred_check
      %p518 = pneg %p517
    $region38: #{conv_block_stack.3} parent=5 // pred_check_branch
      %520 = sbr.rel (%p518) target = $region40
    $region39: #{conv_block_stack.3} parent=5 // pred_region
      %s521 = ssub.s32 %s9, 2
      // Predicated region
      $region41: #{conv_block_stack.3} parent=39 // pred_check
        %p522 = pneg %p106
      $region42: #{conv_block_stack.3} parent=39 // pred_check_branch
        %524 = sbr.rel (%p522) target = $region44
      $region43: #{conv_block_stack.3} parent=39 // pred_region
        %p525 = scmp.lt.s32.totalorder %s15, 1
        %s526 = scalar_select %p525, %s15, 1
        %s527 = smul.addr %s526, 4
        %s528 = smul.addr %s527, 8
        %s529 = scalar_lea.vmem %s3, %s528
      $region44: #{conv_block_stack.3} parent=39 // pred_fallthru
        _
    $region40: #{conv_block_stack.3} parent=5 // pred_fallthru
      _
  $region6: #{conv_block_stack.3} parent=0 // loop_footer
    %s13 = sadd.s32 1, %s9
  $region7: #{conv_block_stack.3} parent=0 // loop_footer_branch
    %8 = sbr.rel target = $region3
  $region8: #{conv_block_stack.3} parent=0 // loop_exit
    _

</llo_original>
